<compile_context>
chip_gen: v6e
topology: v6e:2x2x1
jax: 0.10.0
libtpu: 0.0.40
codegen_flags: <defaults>
</compile_context>

<pallas_src>
import jax
import jax.numpy as jnp
from jax.experimental import pallas as pl
from jax.experimental.pallas import tpu as pltpu

IN_FEATURES = 784      # 28 * 28
HID = 256
TB_MAX = 1024          # batch tile rows; f32 x tile = 3.2 MiB (x2 buffered)


def _leaky_relu(x, slope=0.2):
    return jnp.where(x > 0, x, slope * x)


def discriminator_kernel(x_ref, w1_ref, b1_ref, w2_ref, b2_ref, w3_ref, b3_ref,
                         o_ref):
    """One batch tile.

    x_ref : (tb, 784) f32      w1_ref: (784, 256) bf16   b1_ref: (1, 256) f32
    w2_ref: (256, 256) bf16    b2_ref: (1, 256)   f32
    w3_ref: (1, 256)   f32     b3_ref: (1,)       f32 (SMEM)
    o_ref : (1, 1, tb) f32     sigmoid output, one batch element per lane
    """
    # In-kernel f32 -> bf16 cast (free VPU work hidden under the MXU); avoids a
    # separate XLA pad/cast pass over x in HBM.
    x = x_ref[...].astype(jnp.bfloat16)

    # Layer 1: (tb, 784) @ (784, 256) on the MXU, f32 accumulation.
    h1 = jnp.dot(x, w1_ref[...], preferred_element_type=jnp.float32)
    h1 = _leaky_relu(h1 + b1_ref[...])

    # Layer 2: (tb, 256) @ (256, 256).
    h2 = jnp.dot(h1.astype(jnp.bfloat16), w2_ref[...],
                 preferred_element_type=jnp.float32)
    h2 = _leaky_relu(h2 + b2_ref[...])

    # Layer 3 (out_features == 1): VPU multiply + lane reduction (avoids a
    # 1/128-lane-utilization MXU matmul), then sigmoid on the EUP.
    logit = jnp.sum(h2 * w3_ref[...], axis=-1) + b3_ref[0]          # (tb,)
    prob = jax.nn.sigmoid(logit)                                    # (tb,)

    # Lane-packed store: one batch element per lane -> 4 B of output HBM
    # traffic per row instead of a 512 B broadcast slab.
    o_ref[...] = prob.reshape(o_ref.shape)


def prepare_params(params):
    """Cast/reshape the (in_features, out_features)-layout f32 params once."""
    w1, b1, w2, b2, w3, b3 = params
    return (
        w1.astype(jnp.bfloat16),                    # (784, 256)
        b1.reshape(1, HID).astype(jnp.float32),     # (1, 256)
        w2.astype(jnp.bfloat16),                    # (256, 256)
        b2.reshape(1, HID).astype(jnp.float32),     # (1, 256)
        w3.reshape(HID, 1).T.astype(jnp.float32),   # (256, 1) column -> (1, 256) row
        b3.reshape(1).astype(jnp.float32),          # (1,), lives in SMEM
    )


def discriminator_forward(x, prepared_params, tb_max=TB_MAX):
    """x: (B, 1, 28, 28) or (B, 784) float32. Returns (B, 1) float32."""
    w1, b1, w2, b2, w3, b3 = prepared_params
    B = x.shape[0]
    x2d = x.reshape(B, -1)          # same flattening as torch .view; stays f32
    assert x2d.shape[1] == IN_FEATURES

    # Batch tiling: one full-array tile for B <= tb_max (any B, no padding or
    # alignment copy); otherwise stream tb_max-row tiles.  A ragged last tile
    # (B % tb != 0) is handled by Pallas boundary masking: its junk rows only
    # influence their own output lanes, which are sliced off below.
    tb = B if B <= tb_max else tb_max
    num_tiles = pl.cdiv(B, tb)

    cost = pl.CostEstimate(
        flops=2 * B * (IN_FEATURES * HID + HID * HID + HID),
        transcendentals=B,                                   # sigmoid
        bytes_accessed=(B * (IN_FEATURES * 4 + 4)            # x in, prob out
                        + (IN_FEATURES * HID + HID * HID) * 2  # bf16 weights
                        + (2 * HID + HID + 1) * 4))          # biases + w3 row

    out = pl.pallas_call(
        discriminator_kernel,
        out_shape=jax.ShapeDtypeStruct((num_tiles, 1, tb), jnp.float32),
        grid=(num_tiles,),
        in_specs=[
            pl.BlockSpec((tb, IN_FEATURES), lambda i: (i, 0)),    # x: streamed
            pl.BlockSpec((IN_FEATURES, HID), lambda i: (0, 0)),   # w1: resident
            pl.BlockSpec((1, HID), lambda i: (0, 0)),             # b1
            pl.BlockSpec((HID, HID), lambda i: (0, 0)),           # w2
            pl.BlockSpec((1, HID), lambda i: (0, 0)),             # b2
            pl.BlockSpec((1, HID), lambda i: (0, 0)),             # w3 row
            pl.BlockSpec(memory_space=pltpu.MemorySpace.SMEM),    # b3 scalar
        ],
        out_specs=pl.BlockSpec((1, 1, tb), lambda i: (i, 0, 0)),
        compiler_params=pltpu.CompilerParams(
            dimension_semantics=("parallel",)),
        cost_estimate=cost,
    )(x2d, w1, b1, w2, b2, w3, b3)

    # Unpack the lane-packed (num_tiles, 1, tb) slab back to (B, 1).
    return out.reshape(num_tiles * tb)[:B].reshape(B, 1)


def init_params(key):
    """PyTorch-default-style U(-1/sqrt(fan_in), 1/sqrt(fan_in)) init.
    Weights stored transposed: (in_features, out_features)."""
    ks = jax.random.split(key, 6)

    def lin(kw, kb, fan_in, fan_out):
        bound = 1.0 / jnp.sqrt(fan_in)
        w = jax.random.uniform(kw, (fan_in, fan_out), jnp.float32, -bound, bound)
        b = jax.random.uniform(kb, (1, fan_out), jnp.float32, -bound, bound)
        return w, b

    w1, b1 = lin(ks[0], ks[1], 784, 256)
    w2, b2 = lin(ks[2], ks[3], 256, 256)
    w3, b3 = lin(ks[4], ks[5], 256, 1)
    return (w1, b1, w2, b2, w3, b3)


def reference_forward_bf16(x, params):
    """Pure-JAX reference matching the kernel's bf16-matmul / f32-accumulate."""
    w1, b1, w2, b2, w3, b3 = params
    B = x.shape[0]
    h = x.reshape(B, -1)
    h = jnp.dot(h.astype(jnp.bfloat16), w1.astype(jnp.bfloat16),
                preferred_element_type=jnp.float32) + b1
    h = jnp.where(h > 0, h, 0.2 * h)
    h = jnp.dot(h.astype(jnp.bfloat16), w2.astype(jnp.bfloat16),
                preferred_element_type=jnp.float32) + b2
    h = jnp.where(h > 0, h, 0.2 * h)
    h = h @ w3 + b3
    return jax.nn.sigmoid(h)


def reference_forward_f32(x, params):
    """Full-f32 reference (PyTorch semantics) for a looser sanity check."""
    w1, b1, w2, b2, w3, b3 = params
    B = x.shape[0]
    h = x.reshape(B, -1)
    h = h @ w1 + b1
    h = jnp.where(h > 0, h, 0.2 * h)
    h = h @ w2 + b2
    h = jnp.where(h > 0, h, 0.2 * h)
    h = h @ w3 + b3
    return jax.nn.sigmoid(h)


if __name__ == "__main__":
    key = jax.random.PRNGKey(0)
    k_x, k_x2, k_x3, k_p = jax.random.split(key, 4)

    params = init_params(k_p)
    prepared = prepare_params(params)

    # Small case (single full-array tile), NCHW input like the PyTorch module.
    B = 2
    x = jax.random.normal(k_x, (B, 1, 28, 28), dtype=jnp.float32)
    out = jax.block_until_ready(discriminator_forward(x, prepared))
    ref_bf16 = reference_forward_bf16(x, params)
    ref_f32 = reference_forward_f32(x, params)
    assert out.shape == (B, 1), out.shape
    assert jnp.allclose(out, ref_bf16, atol=2e-3), (out, ref_bf16)
    assert jnp.allclose(out, ref_f32, atol=5e-2), (out, ref_f32)

    # Multi-tile case (small tb override) exercising the batch grid and the
    # per-tile lane-packed output; 256 % 128 == 0 so every tile is full.
    B2 = 256
    x2 = jax.random.normal(k_x2, (B2, 784), dtype=jnp.float32)
    out2 = jax.block_until_ready(discriminator_forward(x2, prepared, tb_max=128))
    ref2 = reference_forward_bf16(x2, params)
    assert out2.shape == (B2, 1), out2.shape
    assert jnp.allclose(out2, ref2, atol=2e-3), (out2, ref2)

    # Non-aligned batch (not a multiple of 8/128): single full-array tile,
    # no padding copy anywhere.
    B3 = 500
    x3 = jax.random.normal(k_x3, (B3, 1, 28, 28), dtype=jnp.float32)
    out3 = jax.block_until_ready(discriminator_forward(x3, prepared))
    ref3 = reference_forward_bf16(x3, params)
    assert out3.shape == (B3, 1), out3.shape
    assert jnp.allclose(out3, ref3, atol=2e-3), (out3, ref3)

    print("KERNEL_OK")
</pallas_src>

<mosaic_0001>
module attributes {stable_mosaic.version = 11 : i64} {
  func.func @discriminator_kernel(%arg0: i32, %arg1: memref<2x784xf32, #tpu.memory_space<vmem>>, %arg2: memref<784x256xbf16, #tpu.memory_space<vmem>>, %arg3: memref<1x256xf32, #tpu.memory_space<vmem>>, %arg4: memref<256x256xbf16, #tpu.memory_space<vmem>>, %arg5: memref<1x256xf32, #tpu.memory_space<vmem>>, %arg6: memref<1x256xf32, #tpu.memory_space<vmem>>, %arg7: memref<1xf32, #tpu.memory_space<smem>>, %arg8: memref<1x1x2xf32, #tpu.memory_space<vmem>>) attributes {dimension_semantics = [#tpu.dimension_semantics<parallel>], iteration_bounds = array<i64: 1>, scalar_prefetch = 0 : i64, scratch_operands = 0 : i64, tpu.core_type = #tpu.core_type<tc>, window_params = [{transform_indices = @transform_0, window_bounds = array<i64: 2, 784>}, {pipeline_mode = #tpu.pipeline_mode<synchronous>, transform_indices = @transform_1, window_bounds = array<i64: 784, 256>}, {pipeline_mode = #tpu.pipeline_mode<synchronous>, transform_indices = @transform_2, window_bounds = array<i64: 1, 256>}, {pipeline_mode = #tpu.pipeline_mode<synchronous>, transform_indices = @transform_3, window_bounds = array<i64: 256, 256>}, {pipeline_mode = #tpu.pipeline_mode<synchronous>, transform_indices = @transform_4, window_bounds = array<i64: 1, 256>}, {pipeline_mode = #tpu.pipeline_mode<synchronous>, transform_indices = @transform_5, window_bounds = array<i64: 1, 256>}, {transform_indices = @transform_6, window_bounds = array<i64: 1>}, {transform_indices = @transform_7, window_bounds = array<i64: 1, 1, 2>}]} {
    %c0 = arith.constant 0 : index
    %c0_0 = arith.constant 0 : index
    %0 = vector.load %arg1[%c0, %c0_0] : memref<2x784xf32, #tpu.memory_space<vmem>>, vector<2x784xf32>
    %1 = arith.truncf %0 : vector<2x784xf32> to vector<2x784xbf16>
    %c0_1 = arith.constant 0 : index
    %c0_2 = arith.constant 0 : index
    %2 = vector.load %arg2[%c0_1, %c0_2] : memref<784x256xbf16, #tpu.memory_space<vmem>>, vector<784x256xbf16>
    %cst = arith.constant dense<0.000000e+00> : vector<2x256xf32>
    %3 = tpu.matmul %1, %2, %cst {dimension_numbers = #tpu.dot_dimension_numbers<[1], [0], [0], [1], [0, 0, 1, 1], [], []>} : vector<2x784xbf16>, vector<784x256xbf16>, vector<2x256xf32> -> vector<2x256xf32>
    %c0_3 = arith.constant 0 : index
    %c0_4 = arith.constant 0 : index
    %4 = vector.load %arg3[%c0_3, %c0_4] : memref<1x256xf32, #tpu.memory_space<vmem>>, vector<1x256xf32>
    %5 = vector.broadcast %4 : vector<1x256xf32> to vector<2x256xf32>
    %6 = arith.addf %3, %5 : vector<2x256xf32>
    %cst_5 = arith.constant 0.000000e+00 : f32
    %7 = vector.broadcast %cst_5 : f32 to vector<2x256xf32>
    %8 = arith.cmpf ogt, %6, %7 : vector<2x256xf32>
    %cst_6 = arith.constant 2.000000e-01 : f32
    %9 = vector.broadcast %cst_6 : f32 to vector<2x256xf32>
    %10 = arith.mulf %9, %6 : vector<2x256xf32>
    %11 = arith.select %8, %6, %10 : vector<2x256xi1>, vector<2x256xf32>
    %12 = arith.truncf %11 : vector<2x256xf32> to vector<2x256xbf16>
    %c0_7 = arith.constant 0 : index
    %c0_8 = arith.constant 0 : index
    %13 = vector.load %arg4[%c0_7, %c0_8] : memref<256x256xbf16, #tpu.memory_space<vmem>>, vector<256x256xbf16>
    %cst_9 = arith.constant dense<0.000000e+00> : vector<2x256xf32>
    %14 = tpu.matmul %12, %13, %cst_9 {dimension_numbers = #tpu.dot_dimension_numbers<[1], [0], [0], [1], [0, 0, 1, 1], [], []>} : vector<2x256xbf16>, vector<256x256xbf16>, vector<2x256xf32> -> vector<2x256xf32>
    %c0_10 = arith.constant 0 : index
    %c0_11 = arith.constant 0 : index
    %15 = vector.load %arg5[%c0_10, %c0_11] : memref<1x256xf32, #tpu.memory_space<vmem>>, vector<1x256xf32>
    %16 = vector.broadcast %15 : vector<1x256xf32> to vector<2x256xf32>
    %17 = arith.addf %14, %16 : vector<2x256xf32>
    %cst_12 = arith.constant 0.000000e+00 : f32
    %18 = vector.broadcast %cst_12 : f32 to vector<2x256xf32>
    %19 = arith.cmpf ogt, %17, %18 : vector<2x256xf32>
    %cst_13 = arith.constant 2.000000e-01 : f32
    %20 = vector.broadcast %cst_13 : f32 to vector<2x256xf32>
    %21 = arith.mulf %20, %17 : vector<2x256xf32>
    %22 = arith.select %19, %17, %21 : vector<2x256xi1>, vector<2x256xf32>
    %c0_14 = arith.constant 0 : index
    %c0_15 = arith.constant 0 : index
    %23 = vector.load %arg6[%c0_14, %c0_15] : memref<1x256xf32, #tpu.memory_space<vmem>>, vector<1x256xf32>
    %24 = vector.broadcast %23 : vector<1x256xf32> to vector<2x256xf32>
    %25 = arith.mulf %22, %24 : vector<2x256xf32>
    %cst_16 = arith.constant dense<0.000000e+00> : vector<2xf32>
    %26 = vector.multi_reduction <add>, %25, %cst_16 [1] : vector<2x256xf32> to vector<2xf32>
    %c0_17 = arith.constant 0 : index
    %27 = memref.load %arg7[%c0_17] : memref<1xf32, #tpu.memory_space<smem>>
    %28 = vector.broadcast %27 : f32 to vector<2xf32>
    %29 = arith.addf %26, %28 : vector<2xf32>
    %30 = arith.negf %29 : vector<2xf32>
    %31 = math.exp %30 : vector<2xf32>
    %cst_18 = arith.constant 1.000000e+00 : f32
    %32 = vector.broadcast %cst_18 : f32 to vector<2xf32>
    %33 = arith.addf %32, %31 : vector<2xf32>
    %34 = arith.divf %32, %33 : vector<2xf32>
    %35 = vector.shape_cast %34 : vector<2xf32> to vector<1x1x2xf32>
    %c0_19 = arith.constant 0 : index
    %c0_20 = arith.constant 0 : index
    %c0_21 = arith.constant 0 : index
    %36 = vector.load %arg8[%c0_19, %c0_20, %c0_21] : memref<1x1x2xf32, #tpu.memory_space<vmem>>, vector<1x1x2xf32>
    tpu.vector_store %arg8[%c0_19, %c0_20, %c0_21], %35 {strides = array<i32>} : memref<1x1x2xf32, #tpu.memory_space<vmem>>, vector<1x1x2xf32>,
    return
  }
  func.func @transform_0(%arg0: i32) -> (i32, i32) {
    %c0_i32 = arith.constant 0 : i32
    %c0_i32_0 = arith.constant 0 : i32
    return %arg0, %c0_i32 : i32, i32
  }
  func.func @transform_1(%arg0: i32) -> (i32, i32) {
    %c0_i32 = arith.constant 0 : i32
    %c0_i32_0 = arith.constant 0 : i32
    %c0_i32_1 = arith.constant 0 : i32
    return %c0_i32, %c0_i32_0 : i32, i32
  }
  func.func @transform_2(%arg0: i32) -> (i32, i32) {
    %c0_i32 = arith.constant 0 : i32
    %c0_i32_0 = arith.constant 0 : i32
    %c0_i32_1 = arith.constant 0 : i32
    return %c0_i32, %c0_i32_0 : i32, i32
  }
  func.func @transform_3(%arg0: i32) -> (i32, i32) {
    %c0_i32 = arith.constant 0 : i32
    %c0_i32_0 = arith.constant 0 : i32
    %c0_i32_1 = arith.constant 0 : i32
    return %c0_i32, %c0_i32_0 : i32, i32
  }
  func.func @transform_4(%arg0: i32) -> (i32, i32) {
    %c0_i32 = arith.constant 0 : i32
    %c0_i32_0 = arith.constant 0 : i32
    %c0_i32_1 = arith.constant 0 : i32
    return %c0_i32, %c0_i32_0 : i32, i32
  }
  func.func @transform_5(%arg0: i32) -> (i32, i32) {
    %c0_i32 = arith.constant 0 : i32
    %c0_i32_0 = arith.constant 0 : i32
    %c0_i32_1 = arith.constant 0 : i32
    return %c0_i32, %c0_i32_0 : i32, i32
  }
  func.func @transform_6(%arg0: i32) -> i32 {
    %c0_i32 = arith.constant 0 : i32
    %c0_i32_0 = arith.constant 0 : i32
    return %c0_i32 : i32
  }
  func.func @transform_7(%arg0: i32) -> (i32, i32, i32) {
    %c0_i32 = arith.constant 0 : i32
    %c0_i32_0 = arith.constant 0 : i32
    %c0_i32_1 = arith.constant 0 : i32
    return %arg0, %c0_i32, %c0_i32_0 : i32, i32, i32
  }
}

</mosaic_0001>

<llo_original>
// kernel: tpu_custom_call.1
$region0: #{tpu_custom_call.1}
  #allocation0 [shape = 'u32[]', space=smem, size = 0x4, offset = 0x4, fixed_abs, tag = 'smem constant byte address 0x4 - core index']
  #allocation1 [shape = 'u32[144,128]{1,0:T(1,128)}', space=vmem, size = 0x12000, scoped, tag = 'internal scratch']
  #allocation2 [shape = 'f32[1]{0:T(128)S(6)}', space=smem, size = 0x200, scoped, tag = 'scoped memory for tpu_custom_call.1']
  %s0 = inlined_call_operand.hbm [shape: f32[2,784], index: 0, kind: input, shape index: {}]
  %s1 = inlined_call_operand.hbm [shape: bf16[784,256], index: 1, kind: input, shape index: {}]
  %s2 = inlined_call_operand.vmem [shape: f32[1,256], index: 2, kind: input, shape index: {}]
  %s3 = inlined_call_operand.hbm [shape: bf16[256,256], index: 3, kind: input, shape index: {}]
  %s4 = inlined_call_operand.vmem [shape: f32[1,256], index: 4, kind: input, shape index: {}]
  %s5 = inlined_call_operand.vmem [shape: f32[1,256], index: 5, kind: input, shape index: {}]
  %s6 = inlined_call_operand.<no memory space> [shape: f32[1], index: 6, kind: input, shape index: {}]
  %s7 = inlined_call_operand.hbm [shape: f32[1,1,2], index: 7, kind: output, shape index: {}]
  %s8 = sld [smem:[#allocation0]]
  $region50: #{tpu_custom_call.1} parent=0
    _
  %s10 = ssub.s32 1, %s8
  %s11 = scalar_select 0, %s10, %s8
  %12 = sst [smem:[#allocation2]] %s6
  $region1: #{tpu_custom_call.1} parent=0
    #allocation3 [shape = 'u8[7168]{0}', space=vmem, size = 0x1c00, scoped, tag = 'input window, operand 0, single buffered']
    #allocation4 [shape = 's32[1]{0}', space=sflag, size = 0x4, scoped, tag = 'scoped memory for tpu_custom_call.1']
    #allocation5 [shape = 's32[1]{0}', space=sflag, size = 0x4, scoped, tag = 'scoped memory for tpu_custom_call.1']
    #allocation6 [shape = 'u8[401408]{0}', space=vmem, size = 0x62000, scoped, tag = 'input window, operand 1, single buffered']
    #allocation7 [shape = 's32[1]{0}', space=sflag, size = 0x4, scoped, tag = 'scoped memory for tpu_custom_call.1']
    #allocation8 [shape = 'u8[131072]{0}', space=vmem, size = 0x20000, scoped, tag = 'input window, operand 3, single buffered']
    #allocation9 [shape = 'u8[512]{0}', space=vmem, size = 0x400, scoped, tag = 'output window, operand 0, single buffered']
    %13 = vsyncpa [#allocation4], 0
    %14 = vsyncpa [#allocation7], 0
    %15 = vsyncpa [#allocation5], 0
    // Predicated region
    $region2: #{tpu_custom_call.1} parent=1 // pred_check
      _
    $region3: #{tpu_custom_call.1} parent=1 // pred_check_branch
      %17 = sbr.rel (0) target = $region5
    $region4: #{tpu_custom_call.1} parent=1 // pred_region
      %s19 = ssub.s32 224, 224
      %20 = vsyncadd [#allocation4], %s19
      %s22 = sshll.u32 [#allocation3], 4
      %s23 = int_to_ptr.vmem [resolvable:$true] %s22
      %25 = dma.hbm_to_vmem [thread:$0]  %s0, 224, %s23, [#allocation4]
    $region5: #{tpu_custom_call.1} parent=1 // pred_fallthru
      _
    // Predicated region
    $region6: #{tpu_custom_call.1} parent=1 // pred_check
      _
    $region7: #{tpu_custom_call.1} parent=1 // pred_check_branch
      %27 = sbr.rel (0) target = $region9
    $region8: #{tpu_custom_call.1} parent=1 // pred_region
      %s29 = ssub.s32 12544, 12544
      %30 = vsyncadd [#allocation7], %s29
      %s31 = sshll.u32 [#allocation6], 4
      %s32 = int_to_ptr.vmem [resolvable:$true] %s31
      %37 = dma.hbm_to_vmem [thread:$0]  %s1, 12544, %s32, [#allocation7], 128, 128, 8
    $region9: #{tpu_custom_call.1} parent=1 // pred_fallthru
      _
    // Predicated region
    $region10: #{tpu_custom_call.1} parent=1 // pred_check
      _
    $region11: #{tpu_custom_call.1} parent=1 // pred_check_branch
      %39 = sbr.rel (0) target = $region13
    $region12: #{tpu_custom_call.1} parent=1 // pred_region
      _
    $region13: #{tpu_custom_call.1} parent=1 // pred_fallthru
      _
    // Predicated region
    $region14: #{tpu_custom_call.1} parent=1 // pred_check
      _
    $region15: #{tpu_custom_call.1} parent=1 // pred_check_branch
      %41 = sbr.rel (0) target = $region17
    $region16: #{tpu_custom_call.1} parent=1 // pred_region
      %s43 = ssub.s32 4096, 4096
      %44 = vsyncadd [#allocation7], %s43
      %s45 = sshll.u32 [#allocation8], 4
      %s46 = int_to_ptr.vmem [resolvable:$true] %s45
      %51 = dma.hbm_to_vmem [thread:$0]  %s3, 4096, %s46, [#allocation7], 128, 128, 8
    $region17: #{tpu_custom_call.1} parent=1 // pred_fallthru
      _
    // Predicated region
    $region18: #{tpu_custom_call.1} parent=1 // pred_check
      _
    $region19: #{tpu_custom_call.1} parent=1 // pred_check_branch
      %53 = sbr.rel (0) target = $region21
    $region20: #{tpu_custom_call.1} parent=1 // pred_region
      _
    $region21: #{tpu_custom_call.1} parent=1 // pred_fallthru
      _
    // Predicated region
    $region22: #{tpu_custom_call.1} parent=1 // pred_check
      _
    $region23: #{tpu_custom_call.1} parent=1 // pred_check_branch
      %55 = sbr.rel (0) target = $region25
    $region24: #{tpu_custom_call.1} parent=1 // pred_region
      _
    $region25: #{tpu_custom_call.1} parent=1 // pred_fallthru
      _
    // Predicated region
    $region26: #{tpu_custom_call.1} parent=1 // pred_check
      _
    $region27: #{tpu_custom_call.1} parent=1 // pred_check_branch
      %57 = sbr.rel (0) target = $region29
    $region28: #{tpu_custom_call.1} parent=1 // pred_region
      _
    $region29: #{tpu_custom_call.1} parent=1 // pred_fallthru
      _
    // Predicated region
    $region30: #{tpu_custom_call.1} parent=1 // pred_check
      _
    $region31: #{tpu_custom_call.1} parent=1 // pred_check_branch
      %59 = sbr.rel (0) target = $region33
    $region32: #{tpu_custom_call.1} parent=1 // pred_region
      %60 = dma.done [#allocation4], 224
    $region33: #{tpu_custom_call.1} parent=1 // pred_fallthru
      _
    // Predicated region
    $region34: #{tpu_custom_call.1} parent=1 // pred_check
      _
    $region35: #{tpu_custom_call.1} parent=1 // pred_check_branch
      %62 = sbr.rel (0) target = $region37
    $region36: #{tpu_custom_call.1} parent=1 // pred_region
      %63 = dma.done [#allocation7], 12544
    $region37: #{tpu_custom_call.1} parent=1 // pred_fallthru
      _
    // Predicated region
    $region38: #{tpu_custom_call.1} parent=1 // pred_check
      _
    $region39: #{tpu_custom_call.1} parent=1 // pred_check_branch
      %65 = sbr.rel (0) target = $region41
    $region40: #{tpu_custom_call.1} parent=1 // pred_region
      %66 = dma.done [#allocation7], 4096
    $region41: #{tpu_custom_call.1} parent=1 // pred_fallthru
      _
    %v68 = vld [vmem:[#allocation3] sm:$0xff]
    %v69 = vld [vmem:[#allocation3 + $0x8] sm:$0x3f]
    %v72 = vcombine.high %v68, %v68
    %v74 = vunpack.c.l.s4 1983009808
    %v75 = vunpack.c.0.s8 %v74
    %v76 = vlaneseq
    %v77 = vshrl.u32 %v76, 7
    %v78 = vsub.s32 %v75, %v77
    %v79 = vrot.slane %v68, %v78
    %v81 = vunpack.c.l.s4 1983009808
    %v82 = vunpack.c.0.s8 %v81
    %v83 = vlaneseq
    %v84 = vshrl.u32 %v83, 7
    %v85 = vsub.s32 %v82, %v84
    %v86 = vrot.slane %v72, %v85
    %v87 = vcombine.high %v79, %v79
    %v88 = vcombine.high %v86, %v86
    %v89 = vcombine.high %v69, %v69
    %v91 = vunpack.c.l.s4 1983009808
    %v92 = vunpack.c.0.s8 %v91
    %v93 = vlaneseq
    %v94 = vshrl.u32 %v93, 7
    %v95 = vsub.s32 %v92, %v94
    %v96 = vrot.slane %v69, %v95
    %v98 = vunpack.c.l.s4 1983009808
    %v99 = vunpack.c.0.s8 %v98
    %v100 = vlaneseq
    %v101 = vshrl.u32 %v100, 7
    %v102 = vsub.s32 %v99, %v101
    %v103 = vrot.slane %v89, %v102
    %v104 = vcombine.high %v96, %v96
    %v112 = vpack.c.bf16 %v79, %v79
    %v113 = vpack.c.bf16 %v87, %v87
    %v114 = vpack.c.bf16 %v86, %v86
    %v115 = vpack.c.bf16 %v88, %v88
    %v116 = vpack.c.bf16 %v96, %v96
    %v117 = vpack.c.bf16 %v104, %v104
    %v118 = vpack.c.bf16 %v103, %v103
    %v119 = vld [vmem:[#allocation6] sm:$0xff]
    %v120 = vld [vmem:[#allocation6 + $0x8] sm:$0xff]
    %v121 = vld [vmem:[#allocation6 + $0x10] sm:$0xff]
    %v122 = vld [vmem:[#allocation6 + $0x18] sm:$0xff]
    %v123 = vld [vmem:[#allocation6 + $0x20] sm:$0xff]
    %v124 = vld [vmem:[#allocation6 + $0x28] sm:$0xff]
    %v125 = vld [vmem:[#allocation6 + $0x30] sm:$0xff]
    %v126 = vld [vmem:[#allocation6 + $0x38] sm:$0xff]
    %v127 = vld [vmem:[#allocation6 + $0x40] sm:$0xff]
    %v128 = vld [vmem:[#allocation6 + $0x48] sm:$0xff]
    %v129 = vld [vmem:[#allocation6 + $0x50] sm:$0xff]
    %v130 = vld [vmem:[#allocation6 + $0x58] sm:$0xff]
    %v131 = vld [vmem:[#allocation6 + $0x60] sm:$0xff]
    %v132 = vld [vmem:[#allocation6 + $0x68] sm:$0xff]
    %v133 = vld [vmem:[#allocation6 + $0x70] sm:$0xff]
    %v134 = vld [vmem:[#allocation6 + $0x78] sm:$0xff]
    %v135 = vld [vmem:[#allocation6 + $0x80] sm:$0xff]
    %v136 = vld [vmem:[#allocation6 + $0x88] sm:$0xff]
    %v137 = vld [vmem:[#allocation6 + $0x90] sm:$0xff]
    %v138 = vld [vmem:[#allocation6 + $0x98] sm:$0xff]
    %v139 = vld [vmem:[#allocation6 + $0xa0] sm:$0xff]
    %v140 = vld [vmem:[#allocation6 + $0xa8] sm:$0xff]
    %v141 = vld [vmem:[#allocation6 + $0xb0] sm:$0xff]
    %v142 = vld [vmem:[#allocation6 + $0xb8] sm:$0xff]
    %v143 = vld [vmem:[#allocation6 + $0xc0] sm:$0xff]
    %v144 = vld [vmem:[#allocation6 + $0xc8] sm:$0xff]
    %v145 = vld [vmem:[#allocation6 + $0xd0] sm:$0xff]
    %v146 = vld [vmem:[#allocation6 + $0xd8] sm:$0xff]
    %v147 = vld [vmem:[#allocation6 + $0xe0] sm:$0xff]
    %v148 = vld [vmem:[#allocation6 + $0xe8] sm:$0xff]
    %v149 = vld [vmem:[#allocation6 + $0xf0] sm:$0xff]
    %v150 = vld [vmem:[#allocation6 + $0xf8] sm:$0xff]
    %v151 = vld [vmem:[#allocation6 + $0x100] sm:$0xff]
    %v152 = vld [vmem:[#allocation6 + $0x108] sm:$0xff]
    %v153 = vld [vmem:[#allocation6 + $0x110] sm:$0xff]
    %v154 = vld [vmem:[#allocation6 + $0x118] sm:$0xff]
    %v155 = vld [vmem:[#allocation6 + $0x120] sm:$0xff]
    %v156 = vld [vmem:[#allocation6 + $0x128] sm:$0xff]
    %v157 = vld [vmem:[#allocation6 + $0x130] sm:$0xff]
    %v158 = vld [vmem:[#allocation6 + $0x138] sm:$0xff]
    %v159 = vld [vmem:[#allocation6 + $0x140] sm:$0xff]
    %v160 = vld [vmem:[#allocation6 + $0x148] sm:$0xff]
    %v161 = vld [vmem:[#allocation6 + $0x150] sm:$0xff]
    %v162 = vld [vmem:[#allocation6 + $0x158] sm:$0xff]
    %v163 = vld [vmem:[#allocation6 + $0x160] sm:$0xff]
    %v164 = vld [vmem:[#allocation6 + $0x168] sm:$0xff]
    %v165 = vld [vmem:[#allocation6 + $0x170] sm:$0xff]
    %v166 = vld [vmem:[#allocation6 + $0x178] sm:$0xff]
    %v167 = vld [vmem:[#allocation6 + $0x180] sm:$0xff]
    %v168 = vld [vmem:[#allocation6 + $0x188] sm:$0xff]
    %v169 = vld [vmem:[#allocation6 + $0x190] sm:$0xff]
    %v170 = vld [vmem:[#allocation6 + $0x198] sm:$0xff]
    %v171 = vld [vmem:[#allocation6 + $0x1a0] sm:$0xff]
    %v172 = vld [vmem:[#allocation6 + $0x1a8] sm:$0xff]
    %v173 = vld [vmem:[#allocation6 + $0x1b0] sm:$0xff]
    %v174 = vld [vmem:[#allocation6 + $0x1b8] sm:$0xff]
    %v175 = vld [vmem:[#allocation6 + $0x1c0] sm:$0xff]
    %v176 = vld [vmem:[#allocation6 + $0x1c8] sm:$0xff]
    %v177 = vld [vmem:[#allocation6 + $0x1d0] sm:$0xff]
    %v178 = vld [vmem:[#allocation6 + $0x1d8] sm:$0xff]
    %v179 = vld [vmem:[#allocation6 + $0x1e0] sm:$0xff]
    %v180 = vld [vmem:[#allocation6 + $0x1e8] sm:$0xff]
    %v181 = vld [vmem:[#allocation6 + $0x1f0] sm:$0xff]
    %v182 = vld [vmem:[#allocation6 + $0x1f8] sm:$0xff]
    %v183 = vld [vmem:[#allocation6 + $0x200] sm:$0xff]
    %v184 = vld [vmem:[#allocation6 + $0x208] sm:$0xff]
    %v185 = vld [vmem:[#allocation6 + $0x210] sm:$0xff]
    %v186 = vld [vmem:[#allocation6 + $0x218] sm:$0xff]
    %v187 = vld [vmem:[#allocation6 + $0x220] sm:$0xff]
    %v188 = vld [vmem:[#allocation6 + $0x228] sm:$0xff]
    %v189 = vld [vmem:[#allocation6 + $0x230] sm:$0xff]
    %v190 = vld [vmem:[#allocation6 + $0x238] sm:$0xff]
    %v191 = vld [vmem:[#allocation6 + $0x240] sm:$0xff]
    %v192 = vld [vmem:[#allocation6 + $0x248] sm:$0xff]
    %v193 = vld [vmem:[#allocation6 + $0x250] sm:$0xff]
    %v194 = vld [vmem:[#allocation6 + $0x258] sm:$0xff]
    %v195 = vld [vmem:[#allocation6 + $0x260] sm:$0xff]
    %v196 = vld [vmem:[#allocation6 + $0x268] sm:$0xff]
    %v197 = vld [vmem:[#allocation6 + $0x270] sm:$0xff]
    %v198 = vld [vmem:[#allocation6 + $0x278] sm:$0xff]
    %v199 = vld [vmem:[#allocation6 + $0x280] sm:$0xff]
    %v200 = vld [vmem:[#allocation6 + $0x288] sm:$0xff]
    %v201 = vld [vmem:[#allocation6 + $0x290] sm:$0xff]
    %v202 = vld [vmem:[#allocation6 + $0x298] sm:$0xff]
    %v203 = vld [vmem:[#allocation6 + $0x2a0] sm:$0xff]
    %v204 = vld [vmem:[#allocation6 + $0x2a8] sm:$0xff]
    %v205 = vld [vmem:[#allocation6 + $0x2b0] sm:$0xff]
    %v206 = vld [vmem:[#allocation6 + $0x2b8] sm:$0xff]
    %v207 = vld [vmem:[#allocation6 + $0x2c0] sm:$0xff]
    %v208 = vld [vmem:[#allocation6 + $0x2c8] sm:$0xff]
    %v209 = vld [vmem:[#allocation6 + $0x2d0] sm:$0xff]
    %v210 = vld [vmem:[#allocation6 + $0x2d8] sm:$0xff]
    %v211 = vld [vmem:[#allocation6 + $0x2e0] sm:$0xff]
    %v212 = vld [vmem:[#allocation6 + $0x2e8] sm:$0xff]
    %v213 = vld [vmem:[#allocation6 + $0x2f0] sm:$0xff]
    %v214 = vld [vmem:[#allocation6 + $0x2f8] sm:$0xff]
    %v215 = vld [vmem:[#allocation6 + $0x300] sm:$0xff]
    %v216 = vld [vmem:[#allocation6 + $0x308] sm:$0xff]
    %v217 = vld [vmem:[%s2] sm:$0x3]
    %v219 = vlaneseq
    %v220 = vshrl.u32 %v219, 7
    %v221 = vsub.s32 0, %v220
    %v222 = vrot.slane %v217, %v221
    %v223 = vlaneseq
    %v224 = vshrl.u32 %v223, 7
    %v225 = vsub.s32 1, %v224
    %v226 = vrot.slane %v217, %v225
    %v327 = vunpack.c.l.b16 %v119
    %v328 = vunpack.c.h.b16 %v119
    %v329 = vunpack.c.l.b16 %v120
    %v330 = vunpack.c.h.b16 %v120
    %v331 = vunpack.c.l.b16 %v121
    %v332 = vunpack.c.h.b16 %v121
    %v333 = vunpack.c.l.b16 %v122
    %v334 = vunpack.c.h.b16 %v122
    %v335 = vunpack.c.l.b16 %v123
    %v336 = vunpack.c.h.b16 %v123
    %v337 = vunpack.c.l.b16 %v124
    %v338 = vunpack.c.h.b16 %v124
    %v339 = vunpack.c.l.b16 %v125
    %v340 = vunpack.c.h.b16 %v125
    %v341 = vunpack.c.l.b16 %v126
    %v342 = vunpack.c.h.b16 %v126
    %v343 = vunpack.c.l.b16 %v127
    %v344 = vunpack.c.h.b16 %v127
    %v345 = vunpack.c.l.b16 %v128
    %v346 = vunpack.c.h.b16 %v128
    %v347 = vunpack.c.l.b16 %v129
    %v348 = vunpack.c.h.b16 %v129
    %v349 = vunpack.c.l.b16 %v130
    %v350 = vunpack.c.h.b16 %v130
    %v351 = vunpack.c.l.b16 %v131
    %v352 = vunpack.c.h.b16 %v131
    %v353 = vunpack.c.l.b16 %v132
    %v354 = vunpack.c.h.b16 %v132
    %v355 = vunpack.c.l.b16 %v133
    %v356 = vunpack.c.h.b16 %v133
    %v357 = vunpack.c.l.b16 %v134
    %v358 = vunpack.c.h.b16 %v134
    %v359 = vunpack.c.l.b16 %v135
    %v360 = vunpack.c.h.b16 %v135
    %v361 = vunpack.c.l.b16 %v136
    %v362 = vunpack.c.h.b16 %v136
    %v363 = vunpack.c.l.b16 %v137
    %v364 = vunpack.c.h.b16 %v137
    %v365 = vunpack.c.l.b16 %v138
    %v366 = vunpack.c.h.b16 %v138
    %v367 = vunpack.c.l.b16 %v139
    %v368 = vunpack.c.h.b16 %v139
    %v369 = vunpack.c.l.b16 %v140
    %v370 = vunpack.c.h.b16 %v140
    %v371 = vunpack.c.l.b16 %v141
    %v372 = vunpack.c.h.b16 %v141
    %v373 = vunpack.c.l.b16 %v142
    %v374 = vunpack.c.h.b16 %v142
    %v375 = vunpack.c.l.b16 %v143
    %v376 = vunpack.c.h.b16 %v143
    %v377 = vunpack.c.l.b16 %v144
    %v378 = vunpack.c.h.b16 %v144
    %v379 = vunpack.c.l.b16 %v145
    %v380 = vunpack.c.h.b16 %v145
    %v381 = vunpack.c.l.b16 %v146
    %v382 = vunpack.c.h.b16 %v146
    %v383 = vunpack.c.l.b16 %v147
    %v384 = vunpack.c.h.b16 %v147
    %v385 = vunpack.c.l.b16 %v148
    %v386 = vunpack.c.h.b16 %v148
    %v387 = vunpack.c.l.b16 %v149
    %v388 = vunpack.c.h.b16 %v149
    %v389 = vunpack.c.l.b16 %v150
    %v390 = vunpack.c.h.b16 %v150
    %v391 = vunpack.c.l.b16 %v151
    %v392 = vunpack.c.h.b16 %v151
    %v393 = vunpack.c.l.b16 %v152
    %v394 = vunpack.c.h.b16 %v152
    %v395 = vunpack.c.l.b16 %v153
    %v396 = vunpack.c.h.b16 %v153
    %v397 = vunpack.c.l.b16 %v154
    %v398 = vunpack.c.h.b16 %v154
    %v399 = vunpack.c.l.b16 %v155
    %v400 = vunpack.c.h.b16 %v155
    %v401 = vunpack.c.l.b16 %v156
    %v402 = vunpack.c.h.b16 %v156
    %v403 = vunpack.c.l.b16 %v157
    %v404 = vunpack.c.h.b16 %v157
    %v405 = vunpack.c.l.b16 %v158
    %v406 = vunpack.c.h.b16 %v158
    %v407 = vunpack.c.l.b16 %v159
    %v408 = vunpack.c.h.b16 %v159
    %v409 = vunpack.c.l.b16 %v160
    %v410 = vunpack.c.h.b16 %v160
    %v411 = vunpack.c.l.b16 %v161
    %v412 = vunpack.c.h.b16 %v161
    %v413 = vunpack.c.l.b16 %v162
    %v414 = vunpack.c.h.b16 %v162
    %v415 = vunpack.c.l.b16 %v163
    %v416 = vunpack.c.h.b16 %v163
    %v417 = vunpack.c.l.b16 %v164
    %v418 = vunpack.c.h.b16 %v164
    %v419 = vunpack.c.l.b16 %v165
    %v420 = vunpack.c.h.b16 %v165
    %v421 = vunpack.c.l.b16 %v166
    %v422 = vunpack.c.h.b16 %v166
    %v423 = vunpack.c.l.b16 %v167
    %v424 = vunpack.c.h.b16 %v167
    %v425 = vunpack.c.l.b16 %v168
    %v426 = vunpack.c.h.b16 %v168
    %v427 = vunpack.c.l.b16 %v169
    %v428 = vunpack.c.h.b16 %v169
    %v429 = vunpack.c.l.b16 %v170
    %v430 = vunpack.c.h.b16 %v170
    %v431 = vunpack.c.l.b16 %v171
    %v432 = vunpack.c.h.b16 %v171
    %v433 = vunpack.c.l.b16 %v172
    %v434 = vunpack.c.h.b16 %v172
    %v435 = vunpack.c.l.b16 %v173
    %v436 = vunpack.c.h.b16 %v173
    %v437 = vunpack.c.l.b16 %v174
    %v438 = vunpack.c.h.b16 %v174
    %v439 = vunpack.c.l.b16 %v175
    %v440 = vunpack.c.h.b16 %v175
    %v441 = vunpack.c.l.b16 %v176
    %v442 = vunpack.c.h.b16 %v176
    %v443 = vunpack.c.l.b16 %v177
    %v444 = vunpack.c.h.b16 %v177
    %v445 = vunpack.c.l.b16 %v178
    %v446 = vunpack.c.h.b16 %v178
    %v447 = vunpack.c.l.b16 %v179
    %v448 = vunpack.c.h.b16 %v179
    %v449 = vunpack.c.l.b16 %v180
    %v450 = vunpack.c.h.b16 %v180
    %v451 = vunpack.c.l.b16 %v181
    %v452 = vunpack.c.h.b16 %v181
    %v453 = vunpack.c.l.b16 %v182
    %v454 = vunpack.c.h.b16 %v182
    %v455 = vunpack.c.l.b16 %v183
    %v456 = vunpack.c.h.b16 %v183
    %v457 = vunpack.c.l.b16 %v184
    %v458 = vunpack.c.h.b16 %v184
    %v459 = vunpack.c.l.b16 %v185
    %v460 = vunpack.c.h.b16 %v185
    %v461 = vunpack.c.l.b16 %v186
    %v462 = vunpack.c.h.b16 %v186
    %v463 = vunpack.c.l.b16 %v187
    %v464 = vunpack.c.h.b16 %v187
    %v465 = vunpack.c.l.b16 %v188
    %v466 = vunpack.c.h.b16 %v188
    %v467 = vunpack.c.l.b16 %v189
    %v468 = vunpack.c.h.b16 %v189
    %v469 = vunpack.c.l.b16 %v190
    %v470 = vunpack.c.h.b16 %v190
    %v471 = vunpack.c.l.b16 %v191
    %v472 = vunpack.c.h.b16 %v191
    %v473 = vunpack.c.l.b16 %v192
    %v474 = vunpack.c.h.b16 %v192
    %v475 = vunpack.c.l.b16 %v193
    %v476 = vunpack.c.h.b16 %v193
    %v477 = vunpack.c.l.b16 %v194
    %v478 = vunpack.c.h.b16 %v194
    %v479 = vunpack.c.l.b16 %v195
    %v480 = vunpack.c.h.b16 %v195
    %v481 = vunpack.c.l.b16 %v196
    %v482 = vunpack.c.h.b16 %v196
    %v483 = vunpack.c.l.b16 %v197
    %v484 = vunpack.c.h.b16 %v197
    %v485 = vunpack.c.l.b16 %v198
    %v486 = vunpack.c.h.b16 %v198
    %v487 = vunpack.c.l.b16 %v199
    %v488 = vunpack.c.h.b16 %v199
    %v489 = vunpack.c.l.b16 %v200
    %v490 = vunpack.c.h.b16 %v200
    %v491 = vunpack.c.l.b16 %v201
    %v492 = vunpack.c.h.b16 %v201
    %v493 = vunpack.c.l.b16 %v202
    %v494 = vunpack.c.h.b16 %v202
    %v495 = vunpack.c.l.b16 %v203
    %v496 = vunpack.c.h.b16 %v203
    %v497 = vunpack.c.l.b16 %v204
    %v498 = vunpack.c.h.b16 %v204
    %v499 = vunpack.c.l.b16 %v205
    %v500 = vunpack.c.h.b16 %v205
    %v501 = vunpack.c.l.b16 %v206
    %v502 = vunpack.c.h.b16 %v206
    %v503 = vunpack.c.l.b16 %v207
    %v504 = vunpack.c.h.b16 %v207
    %v505 = vunpack.c.l.b16 %v208
    %v506 = vunpack.c.h.b16 %v208
    %v507 = vunpack.c.l.b16 %v209
    %v508 = vunpack.c.h.b16 %v209
    %v509 = vunpack.c.l.b16 %v210
    %v510 = vunpack.c.h.b16 %v210
    %v511 = vunpack.c.l.b16 %v211
    %v512 = vunpack.c.h.b16 %v211
    %v513 = vunpack.c.l.b16 %v212
    %v514 = vunpack.c.h.b16 %v212
    %v515 = vunpack.c.l.b16 %v213
    %v516 = vunpack.c.h.b16 %v213
    %v517 = vunpack.c.l.b16 %v214
    %v518 = vunpack.c.h.b16 %v214
    %v519 = vunpack.c.l.b16 %v215
    %v520 = vunpack.c.h.b16 %v215
    %v521 = vunpack.c.l.b16 %v216
    %v522 = vunpack.c.h.b16 %v216
    %v523 = vpack.c.b16 %v329, %v327
    %v524 = vpack.c.b16 %v330, %v328
    %v525 = vpack.c.b16 %v333, %v331
    %v526 = vpack.c.b16 %v334, %v332
    %v527 = vpack.c.b16 %v337, %v335
    %v528 = vpack.c.b16 %v338, %v336
    %v529 = vpack.c.b16 %v341, %v339
    %v530 = vpack.c.b16 %v342, %v340
    %v531 = vpack.c.b16 %v345, %v343
    %v532 = vpack.c.b16 %v346, %v344
    %v533 = vpack.c.b16 %v349, %v347
    %v534 = vpack.c.b16 %v350, %v348
    %v535 = vpack.c.b16 %v353, %v351
    %v536 = vpack.c.b16 %v354, %v352
    %v537 = vpack.c.b16 %v357, %v355
    %v538 = vpack.c.b16 %v358, %v356
    %v539 = vpack.c.b16 %v361, %v359
    %v540 = vpack.c.b16 %v362, %v360
    %v541 = vpack.c.b16 %v365, %v363
    %v542 = vpack.c.b16 %v366, %v364
    %v543 = vpack.c.b16 %v369, %v367
    %v544 = vpack.c.b16 %v370, %v368
    %v545 = vpack.c.b16 %v373, %v371
    %v546 = vpack.c.b16 %v374, %v372
    %v547 = vpack.c.b16 %v377, %v375
    %v548 = vpack.c.b16 %v378, %v376
    %v549 = vpack.c.b16 %v381, %v379
    %v550 = vpack.c.b16 %v382, %v380
    %v551 = vpack.c.b16 %v385, %v383
    %v552 = vpack.c.b16 %v386, %v384
    %v553 = vpack.c.b16 %v389, %v387
    %v554 = vpack.c.b16 %v390, %v388
    %v555 = vpack.c.b16 %v393, %v391
    %v556 = vpack.c.b16 %v394, %v392
    %v557 = vpack.c.b16 %v397, %v395
    %v558 = vpack.c.b16 %v398, %v396
    %v559 = vpack.c.b16 %v401, %v399
    %v560 = vpack.c.b16 %v402, %v400
    %v561 = vpack.c.b16 %v405, %v403
    %v562 = vpack.c.b16 %v406, %v404
    %v563 = vpack.c.b16 %v409, %v407
    %v564 = vpack.c.b16 %v410, %v408
    %v565 = vpack.c.b16 %v413, %v411
    %v566 = vpack.c.b16 %v414, %v412
    %v567 = vpack.c.b16 %v417, %v415
    %v568 = vpack.c.b16 %v418, %v416
    %v569 = vpack.c.b16 %v421, %v419
    %v570 = vpack.c.b16 %v422, %v420
    %v571 = vpack.c.b16 %v425, %v423
    %v572 = vpack.c.b16 %v426, %v424
    %v573 = vpack.c.b16 %v429, %v427
    %v574 = vpack.c.b16 %v430, %v428
    %v575 = vpack.c.b16 %v433, %v431
    %v576 = vpack.c.b16 %v434, %v432
    %v577 = vpack.c.b16 %v437, %v435
    %v578 = vpack.c.b16 %v438, %v436
    %v579 = vpack.c.b16 %v441, %v439
    %v580 = vpack.c.b16 %v442, %v440
    %v581 = vpack.c.b16 %v445, %v443
    %v582 = vpack.c.b16 %v446, %v444
    %v583 = vpack.c.b16 %v449, %v447
    %v584 = vpack.c.b16 %v450, %v448
    %v585 = vpack.c.b16 %v453, %v451
    %v586 = vpack.c.b16 %v454, %v452
    %v587 = vpack.c.b16 %v457, %v455
    %v588 = vpack.c.b16 %v458, %v456
    %v589 = vpack.c.b16 %v461, %v459
    %v590 = vpack.c.b16 %v462, %v460
    %v591 = vpack.c.b16 %v465, %v463
    %v592 = vpack.c.b16 %v466, %v464
    %v593 = vpack.c.b16 %v469, %v467
    %v594 = vpack.c.b16 %v470, %v468
    %v595 = vpack.c.b16 %v473, %v471
    %v596 = vpack.c.b16 %v474, %v472
    %v597 = vpack.c.b16 %v477, %v475
    %v598 = vpack.c.b16 %v478, %v476
    %v599 = vpack.c.b16 %v481, %v479
    %v600 = vpack.c.b16 %v482, %v480
    %v601 = vpack.c.b16 %v485, %v483
    %v602 = vpack.c.b16 %v486, %v484
    %v603 = vpack.c.b16 %v489, %v487
    %v604 = vpack.c.b16 %v490, %v488
    %v605 = vpack.c.b16 %v493, %v491
    %v606 = vpack.c.b16 %v494, %v492
    %v607 = vpack.c.b16 %v497, %v495
    %v608 = vpack.c.b16 %v498, %v496
    %v609 = vpack.c.b16 %v501, %v499
    %v610 = vpack.c.b16 %v502, %v500
    %v611 = vpack.c.b16 %v505, %v503
    %v612 = vpack.c.b16 %v506, %v504
    %v613 = vpack.c.b16 %v509, %v507
    %v614 = vpack.c.b16 %v510, %v508
    %v615 = vpack.c.b16 %v513, %v511
    %v616 = vpack.c.b16 %v514, %v512
    %v617 = vpack.c.b16 %v517, %v515
    %v618 = vpack.c.b16 %v518, %v516
    %v619 = vpack.c.b16 %v521, %v519
    %v620 = vpack.c.b16 %v522, %v520
    %vm719 = vcmask 130048
    %v721 = vsel %vm719, %v118, 0
    %723 = vmatprep.subr.bf16.mxu0 %v538
    %724 = vmatpush1.bf16.msra.mxu0 %v537
    %725 = vmatprep.subr.bf16.mxu0 %v536
    %726 = vmatpush1.bf16.msra.mxu0 %v535
    %727 = vmatprep.subr.bf16.mxu0 %v534
    %728 = vmatpush1.bf16.msra.mxu0 %v533
    %729 = vmatprep.subr.bf16.mxu0 %v532
    %730 = vmatpush1.bf16.msra.mxu0 %v531
    %731 = vmatprep.subr.bf16.mxu0 %v530
    %732 = vmatpush1.bf16.msra.mxu0 %v529
    %733 = vmatprep.subr.bf16.mxu0 %v528
    %734 = vmatpush1.bf16.msra.mxu0 %v527
    %735 = vmatprep.subr.bf16.mxu0 %v526
    %736 = vmatpush1.bf16.msra.mxu0 %v525
    %737 = vmatprep.subr.bf16.mxu0 %v524
    %738 = vmatpush1.bf16.msra.mxu0 %v523
    %739 = vmatprep.subr.bf16.mxu0 %v554
    %740 = vmatpush2.bf16.msra.mxu0 %v553
    %741 = vmatprep.subr.bf16.mxu0 %v552
    %742 = vmatpush2.bf16.msra.mxu0 %v551
    %743 = vmatprep.subr.bf16.mxu0 %v550
    %744 = vmatpush2.bf16.msra.mxu0 %v549
    %745 = vmatprep.subr.bf16.mxu0 %v548
    %746 = vmatpush2.bf16.msra.mxu0 %v547
    %747 = vmatprep.subr.bf16.mxu0 %v546
    %748 = vmatpush2.bf16.msra.mxu0 %v545
    %749 = vmatprep.subr.bf16.mxu0 %v544
    %750 = vmatpush2.bf16.msra.mxu0 %v543
    %751 = vmatprep.subr.bf16.mxu0 %v542
    %752 = vmatpush2.bf16.msra.mxu0 %v541
    %753 = vmatprep.subr.bf16.mxu0 %v540
    %754 = vmatpush2.bf16.msra.mxu0 %v539
    %755 = vmatprep.mubr.bf16.mxu0 %v113
    %756 = vmatmul.mubr.bf16.gmra.mxu0 %v112
    %v757 = vpop.f32.mrf.mxu0
    %v758 = vadd.f32 %v222, %v757
    %v759 = vpop.f32.mrf.mxu0
    %v760 = vadd.f32 %v226, %v759
    %v761 = vpop.f32.mrf.mxu0
    %v762 = vpop.f32.mrf.mxu0
    %763 = vdwg.mxu0
    %764 = vmatprep.subr.bf16.mxu0 %v570
    %765 = vmatpush1.bf16.msra.mxu0 %v569
    %766 = vmatprep.subr.bf16.mxu0 %v568
    %767 = vmatpush1.bf16.msra.mxu0 %v567
    %768 = vmatprep.subr.bf16.mxu0 %v566
    %769 = vmatpush1.bf16.msra.mxu0 %v565
    %770 = vmatprep.subr.bf16.mxu0 %v564
    %771 = vmatpush1.bf16.msra.mxu0 %v563
    %772 = vmatprep.subr.bf16.mxu0 %v562
    %773 = vmatpush1.bf16.msra.mxu0 %v561
    %774 = vmatprep.subr.bf16.mxu0 %v560
    %775 = vmatpush1.bf16.msra.mxu0 %v559
    %776 = vmatprep.subr.bf16.mxu0 %v558
    %777 = vmatpush1.bf16.msra.mxu0 %v557
    %778 = vmatprep.subr.bf16.mxu0 %v556
    %779 = vmatpush1.bf16.msra.mxu0 %v555
    %780 = vmatprep.subr.bf16.mxu0 %v586
    %781 = vmatpush2.bf16.msra.mxu0 %v585
    %782 = vmatprep.subr.bf16.mxu0 %v584
    %783 = vmatpush2.bf16.msra.mxu0 %v583
    %784 = vmatprep.subr.bf16.mxu0 %v582
    %785 = vmatpush2.bf16.msra.mxu0 %v581
    %786 = vmatprep.subr.bf16.mxu0 %v580
    %787 = vmatpush2.bf16.msra.mxu0 %v579
    %788 = vmatprep.subr.bf16.mxu0 %v578
    %789 = vmatpush2.bf16.msra.mxu0 %v577
    %790 = vmatprep.subr.bf16.mxu0 %v576
    %791 = vmatpush2.bf16.msra.mxu0 %v575
    %792 = vmatprep.subr.bf16.mxu0 %v574
    %793 = vmatpush2.bf16.msra.mxu0 %v573
    %794 = vmatprep.subr.bf16.mxu0 %v572
    %795 = vmatpush2.bf16.msra.mxu0 %v571
    %796 = vmatprep.mubr.bf16.mxu0 %v115
    %797 = vmatmul.mubr.bf16.gmra.mxu0 %v114
    %v798 = vpop.f32.mrf.mxu0
    %v799 = vadd.f32 %v758, %v798
    %v800 = vpop.f32.mrf.mxu0
    %v801 = vadd.f32 %v760, %v800
    %v802 = vpop.f32.mrf.mxu0
    %v803 = vpop.f32.mrf.mxu0
    %804 = vdwg.mxu0
    %805 = vmatprep.subr.bf16.mxu0 %v602
    %806 = vmatpush1.bf16.msra.mxu0 %v601
    %807 = vmatprep.subr.bf16.mxu0 %v600
    %808 = vmatpush1.bf16.msra.mxu0 %v599
    %809 = vmatprep.subr.bf16.mxu0 %v598
    %810 = vmatpush1.bf16.msra.mxu0 %v597
    %811 = vmatprep.subr.bf16.mxu0 %v596
    %812 = vmatpush1.bf16.msra.mxu0 %v595
    %813 = vmatprep.subr.bf16.mxu0 %v594
    %814 = vmatpush1.bf16.msra.mxu0 %v593
    %815 = vmatprep.subr.bf16.mxu0 %v592
    %816 = vmatpush1.bf16.msra.mxu0 %v591
    %817 = vmatprep.subr.bf16.mxu0 %v590
    %818 = vmatpush1.bf16.msra.mxu0 %v589
    %819 = vmatprep.subr.bf16.mxu0 %v588
    %820 = vmatpush1.bf16.msra.mxu0 %v587
    %821 = vmatprep.subr.bf16.mxu0 %v618
    %822 = vmatpush2.bf16.msra.mxu0 %v617
    %823 = vmatprep.subr.bf16.mxu0 %v616
    %824 = vmatpush2.bf16.msra.mxu0 %v615
    %825 = vmatprep.subr.bf16.mxu0 %v614
    %826 = vmatpush2.bf16.msra.mxu0 %v613
    %827 = vmatprep.subr.bf16.mxu0 %v612
    %828 = vmatpush2.bf16.msra.mxu0 %v611
    %829 = vmatprep.subr.bf16.mxu0 %v610
    %830 = vmatpush2.bf16.msra.mxu0 %v609
    %831 = vmatprep.subr.bf16.mxu0 %v608
    %832 = vmatpush2.bf16.msra.mxu0 %v607
    %833 = vmatprep.subr.bf16.mxu0 %v606
    %834 = vmatpush2.bf16.msra.mxu0 %v605
    %835 = vmatprep.subr.bf16.mxu0 %v604
    %836 = vmatpush2.bf16.msra.mxu0 %v603
    %837 = vmatprep.mubr.bf16.mxu0 %v117
    %838 = vmatmul.mubr.bf16.gmra.mxu0 %v116
    %v839 = vpop.f32.mrf.mxu0
    %v840 = vadd.f32 %v799, %v839
    %v841 = vpop.f32.mrf.mxu0
    %v842 = vadd.f32 %v801, %v841
    %v843 = vpop.f32.mrf.mxu0
    %v844 = vpop.f32.mrf.mxu0
    %845 = vdwg.mxu0
    %846 = vmatprep.subr.bf16.mxu0 0
    %847 = vmatpush1.bf16.msra.mxu0 0
    %848 = vmatprep.subr.bf16.mxu0 0
    %849 = vmatpush1.bf16.msra.mxu0 0
    %850 = vmatprep.subr.bf16.mxu0 0
    %851 = vmatpush1.bf16.msra.mxu0 0
    %852 = vmatprep.subr.bf16.mxu0 0
    %853 = vmatpush1.bf16.msra.mxu0 0
    %854 = vmatprep.subr.bf16.mxu0 0
    %855 = vmatpush1.bf16.msra.mxu0 0
    %856 = vmatprep.subr.bf16.mxu0 0
    %857 = vmatpush1.bf16.msra.mxu0 0
    %858 = vmatprep.subr.bf16.mxu0 0
    %859 = vmatpush1.bf16.msra.mxu0 0
    %860 = vmatprep.subr.bf16.mxu0 %v620
    %861 = vmatpush1.bf16.msra.mxu0 %v619
    %862 = vmatprep.subr.bf16.mxu0 0
    %863 = vmatpush2.bf16.msra.mxu0 0
    %864 = vmatprep.subr.bf16.mxu0 0
    %865 = vmatpush2.bf16.msra.mxu0 0
    %866 = vmatprep.subr.bf16.mxu0 0
    %867 = vmatpush2.bf16.msra.mxu0 0
    %868 = vmatprep.subr.bf16.mxu0 0
    %869 = vmatpush2.bf16.msra.mxu0 0
    %870 = vmatprep.subr.bf16.mxu0 0
    %871 = vmatpush2.bf16.msra.mxu0 0
    %872 = vmatprep.subr.bf16.mxu0 0
    %873 = vmatpush2.bf16.msra.mxu0 0
    %874 = vmatprep.subr.bf16.mxu0 0
    %875 = vmatpush2.bf16.msra.mxu0 0
    %876 = vmatprep.subr.bf16.mxu0 0
    %877 = vmatpush2.bf16.msra.mxu0 0
    %878 = vmatprep.mubr.bf16.mxu0 0
    %879 = vmatmul.mubr.bf16.gmra.mxu0 %v721
    %v880 = vpop.f32.mrf.mxu0
    %v881 = vadd.f32 %v840, %v880
    %v882 = vpop.f32.mrf.mxu0
    %v883 = vadd.f32 %v842, %v882
    %v884 = vpop.f32.mrf.mxu0
    %v885 = vpop.f32.mrf.mxu0
    %886 = vdwg.mxu0
    %vm887 = vcmp.gt.f32.partialorder %v881, 0.0
    %vm888 = vcmp.gt.f32.partialorder %v883, 0.0
    %v889 = vmul.f32 %v881, 0.2
    %v890 = vmul.f32 %v883, 0.2
    %v891 = vsel %vm887, %v881, %v889
    %v892 = vsel %vm888, %v883, %v890
    %v893 = vpack.c.bf16 %v891, %v891
    %v894 = vpack.c.bf16 %v892, %v892
    %v895 = vld [vmem:[#allocation8] sm:$0xff]
    %v896 = vld [vmem:[#allocation8 + $0x8] sm:$0xff]
    %v897 = vld [vmem:[#allocation8 + $0x10] sm:$0xff]
    %v898 = vld [vmem:[#allocation8 + $0x18] sm:$0xff]
    %v899 = vld [vmem:[#allocation8 + $0x20] sm:$0xff]
    %v900 = vld [vmem:[#allocation8 + $0x28] sm:$0xff]
    %v901 = vld [vmem:[#allocation8 + $0x30] sm:$0xff]
    %v902 = vld [vmem:[#allocation8 + $0x38] sm:$0xff]
    %v903 = vld [vmem:[#allocation8 + $0x40] sm:$0xff]
    %v904 = vld [vmem:[#allocation8 + $0x48] sm:$0xff]
    %v905 = vld [vmem:[#allocation8 + $0x50] sm:$0xff]
    %v906 = vld [vmem:[#allocation8 + $0x58] sm:$0xff]
    %v907 = vld [vmem:[#allocation8 + $0x60] sm:$0xff]
    %v908 = vld [vmem:[#allocation8 + $0x68] sm:$0xff]
    %v909 = vld [vmem:[#allocation8 + $0x70] sm:$0xff]
    %v910 = vld [vmem:[#allocation8 + $0x78] sm:$0xff]
    %v911 = vld [vmem:[#allocation8 + $0x80] sm:$0xff]
    %v912 = vld [vmem:[#allocation8 + $0x88] sm:$0xff]
    %v913 = vld [vmem:[#allocation8 + $0x90] sm:$0xff]
    %v914 = vld [vmem:[#allocation8 + $0x98] sm:$0xff]
    %v915 = vld [vmem:[#allocation8 + $0xa0] sm:$0xff]
    %v916 = vld [vmem:[#allocation8 + $0xa8] sm:$0xff]
    %v917 = vld [vmem:[#allocation8 + $0xb0] sm:$0xff]
    %v918 = vld [vmem:[#allocation8 + $0xb8] sm:$0xff]
    %v919 = vld [vmem:[#allocation8 + $0xc0] sm:$0xff]
    %v920 = vld [vmem:[#allocation8 + $0xc8] sm:$0xff]
    %v921 = vld [vmem:[#allocation8 + $0xd0] sm:$0xff]
    %v922 = vld [vmem:[#allocation8 + $0xd8] sm:$0xff]
    %v923 = vld [vmem:[#allocation8 + $0xe0] sm:$0xff]
    %v924 = vld [vmem:[#allocation8 + $0xe8] sm:$0xff]
    %v925 = vld [vmem:[#allocation8 + $0xf0] sm:$0xff]
    %v926 = vld [vmem:[#allocation8 + $0xf8] sm:$0xff]
    %v927 = vld [vmem:[%s4] sm:$0x3]
    %v929 = vlaneseq
    %v930 = vshrl.u32 %v929, 7
    %v931 = vsub.s32 0, %v930
    %v932 = vrot.slane %v927, %v931
    %v933 = vlaneseq
    %v934 = vshrl.u32 %v933, 7
    %v935 = vsub.s32 1, %v934
    %v936 = vrot.slane %v927, %v935
    %v971 = vunpack.c.l.b16 %v895
    %v972 = vunpack.c.h.b16 %v895
    %v973 = vunpack.c.l.b16 %v896
    %v974 = vunpack.c.h.b16 %v896
    %v975 = vunpack.c.l.b16 %v897
    %v976 = vunpack.c.h.b16 %v897
    %v977 = vunpack.c.l.b16 %v898
    %v978 = vunpack.c.h.b16 %v898
    %v979 = vunpack.c.l.b16 %v899
    %v980 = vunpack.c.h.b16 %v899
    %v981 = vunpack.c.l.b16 %v900
    %v982 = vunpack.c.h.b16 %v900
    %v983 = vunpack.c.l.b16 %v901
    %v984 = vunpack.c.h.b16 %v901
    %v985 = vunpack.c.l.b16 %v902
    %v986 = vunpack.c.h.b16 %v902
    %v987 = vunpack.c.l.b16 %v903
    %v988 = vunpack.c.h.b16 %v903
    %v989 = vunpack.c.l.b16 %v904
    %v990 = vunpack.c.h.b16 %v904
    %v991 = vunpack.c.l.b16 %v905
    %v992 = vunpack.c.h.b16 %v905
    %v993 = vunpack.c.l.b16 %v906
    %v994 = vunpack.c.h.b16 %v906
    %v995 = vunpack.c.l.b16 %v907
    %v996 = vunpack.c.h.b16 %v907
    %v997 = vunpack.c.l.b16 %v908
    %v998 = vunpack.c.h.b16 %v908
    %v999 = vunpack.c.l.b16 %v909
    %v1000 = vunpack.c.h.b16 %v909
    %v1001 = vunpack.c.l.b16 %v910
    %v1002 = vunpack.c.h.b16 %v910
    %v1003 = vunpack.c.l.b16 %v911
    %v1004 = vunpack.c.h.b16 %v911
    %v1005 = vunpack.c.l.b16 %v912
    %v1006 = vunpack.c.h.b16 %v912
    %v1007 = vunpack.c.l.b16 %v913
    %v1008 = vunpack.c.h.b16 %v913
    %v1009 = vunpack.c.l.b16 %v914
    %v1010 = vunpack.c.h.b16 %v914
    %v1011 = vunpack.c.l.b16 %v915
    %v1012 = vunpack.c.h.b16 %v915
    %v1013 = vunpack.c.l.b16 %v916
    %v1014 = vunpack.c.h.b16 %v916
    %v1015 = vunpack.c.l.b16 %v917
    %v1016 = vunpack.c.h.b16 %v917
    %v1017 = vunpack.c.l.b16 %v918
    %v1018 = vunpack.c.h.b16 %v918
    %v1019 = vunpack.c.l.b16 %v919
    %v1020 = vunpack.c.h.b16 %v919
    %v1021 = vunpack.c.l.b16 %v920
    %v1022 = vunpack.c.h.b16 %v920
    %v1023 = vunpack.c.l.b16 %v921
    %v1024 = vunpack.c.h.b16 %v921
    %v1025 = vunpack.c.l.b16 %v922
    %v1026 = vunpack.c.h.b16 %v922
    %v1027 = vunpack.c.l.b16 %v923
    %v1028 = vunpack.c.h.b16 %v923
    %v1029 = vunpack.c.l.b16 %v924
    %v1030 = vunpack.c.h.b16 %v924
    %v1031 = vunpack.c.l.b16 %v925
    %v1032 = vunpack.c.h.b16 %v925
    %v1033 = vunpack.c.l.b16 %v926
    %v1034 = vunpack.c.h.b16 %v926
    %v1035 = vpack.c.b16 %v973, %v971
    %v1036 = vpack.c.b16 %v974, %v972
    %v1037 = vpack.c.b16 %v977, %v975
    %v1038 = vpack.c.b16 %v978, %v976
    %v1039 = vpack.c.b16 %v981, %v979
    %v1040 = vpack.c.b16 %v982, %v980
    %v1041 = vpack.c.b16 %v985, %v983
    %v1042 = vpack.c.b16 %v986, %v984
    %v1043 = vpack.c.b16 %v989, %v987
    %v1044 = vpack.c.b16 %v990, %v988
    %v1045 = vpack.c.b16 %v993, %v991
    %v1046 = vpack.c.b16 %v994, %v992
    %v1047 = vpack.c.b16 %v997, %v995
    %v1048 = vpack.c.b16 %v998, %v996
    %v1049 = vpack.c.b16 %v1001, %v999
    %v1050 = vpack.c.b16 %v1002, %v1000
    %v1051 = vpack.c.b16 %v1005, %v1003
    %v1052 = vpack.c.b16 %v1006, %v1004
    %v1053 = vpack.c.b16 %v1009, %v1007
    %v1054 = vpack.c.b16 %v1010, %v1008
    %v1055 = vpack.c.b16 %v1013, %v1011
    %v1056 = vpack.c.b16 %v1014, %v1012
    %v1057 = vpack.c.b16 %v1017, %v1015
    %v1058 = vpack.c.b16 %v1018, %v1016
    %v1059 = vpack.c.b16 %v1021, %v1019
    %v1060 = vpack.c.b16 %v1022, %v1020
    %v1061 = vpack.c.b16 %v1025, %v1023
    %v1062 = vpack.c.b16 %v1026, %v1024
    %v1063 = vpack.c.b16 %v1029, %v1027
    %v1064 = vpack.c.b16 %v1030, %v1028
    %v1065 = vpack.c.b16 %v1033, %v1031
    %v1066 = vpack.c.b16 %v1034, %v1032
    %1099 = vmatprep.subr.bf16.mxu0 %v1050
    %1100 = vmatpush1.bf16.msra.mxu0 %v1049
    %1101 = vmatprep.subr.bf16.mxu0 %v1048
    %1102 = vmatpush1.bf16.msra.mxu0 %v1047
    %1103 = vmatprep.subr.bf16.mxu0 %v1046
    %1104 = vmatpush1.bf16.msra.mxu0 %v1045
    %1105 = vmatprep.subr.bf16.mxu0 %v1044
    %1106 = vmatpush1.bf16.msra.mxu0 %v1043
    %1107 = vmatprep.subr.bf16.mxu0 %v1042
    %1108 = vmatpush1.bf16.msra.mxu0 %v1041
    %1109 = vmatprep.subr.bf16.mxu0 %v1040
    %1110 = vmatpush1.bf16.msra.mxu0 %v1039
    %1111 = vmatprep.subr.bf16.mxu0 %v1038
    %1112 = vmatpush1.bf16.msra.mxu0 %v1037
    %1113 = vmatprep.subr.bf16.mxu0 %v1036
    %1114 = vmatpush1.bf16.msra.mxu0 %v1035
    %1115 = vmatprep.subr.bf16.mxu0 %v1066
    %1116 = vmatpush2.bf16.msra.mxu0 %v1065
    %1117 = vmatprep.subr.bf16.mxu0 %v1064
    %1118 = vmatpush2.bf16.msra.mxu0 %v1063
    %1119 = vmatprep.subr.bf16.mxu0 %v1062
    %1120 = vmatpush2.bf16.msra.mxu0 %v1061
    %1121 = vmatprep.subr.bf16.mxu0 %v1060
    %1122 = vmatpush2.bf16.msra.mxu0 %v1059
    %1123 = vmatprep.subr.bf16.mxu0 %v1058
    %1124 = vmatpush2.bf16.msra.mxu0 %v1057
    %1125 = vmatprep.subr.bf16.mxu0 %v1056
    %1126 = vmatpush2.bf16.msra.mxu0 %v1055
    %1127 = vmatprep.subr.bf16.mxu0 %v1054
    %1128 = vmatpush2.bf16.msra.mxu0 %v1053
    %1129 = vmatprep.subr.bf16.mxu0 %v1052
    %1130 = vmatpush2.bf16.msra.mxu0 %v1051
    %1131 = vmatprep.mubr.bf16.mxu0 %v894
    %1132 = vmatmul.mubr.bf16.gmra.mxu0 %v893
    %v1133 = vpop.f32.mrf.mxu0
    %v1134 = vadd.f32 %v932, %v1133
    %v1135 = vpop.f32.mrf.mxu0
    %v1136 = vadd.f32 %v936, %v1135
    %v1137 = vpop.f32.mrf.mxu0
    %v1138 = vpop.f32.mrf.mxu0
    %1139 = vdwg.mxu0
    %vm1140 = vcmp.gt.f32.partialorder %v1134, 0.0
    %vm1141 = vcmp.gt.f32.partialorder %v1136, 0.0
    %v1142 = vmul.f32 %v1134, 0.2
    %v1143 = vmul.f32 %v1136, 0.2
    %v1144 = vsel %vm1140, %v1134, %v1142
    %v1145 = vsel %vm1141, %v1136, %v1143
    %v1146 = vld [vmem:[%s5] sm:$0x3]
    %v1148 = vlaneseq
    %v1149 = vshrl.u32 %v1148, 7
    %v1150 = vsub.s32 0, %v1149
    %v1151 = vrot.slane %v1146, %v1150
    %v1152 = vlaneseq
    %v1153 = vshrl.u32 %v1152, 7
    %v1154 = vsub.s32 1, %v1153
    %v1155 = vrot.slane %v1146, %v1154
    %v1158 = vmul.f32 %v1144, %v1151
    %v1159 = vmul.f32 %v1145, %v1155
    %vm1160 = vcmask 1041408
    %v1161 = vsel %vm1160, %v1158, 0.0
    %v1162 = vsel %vm1160, %v1159, 0.0
    %v1163 = vadd.f32 %v1161, %v1162
    %1164 = vadd.xlane.f32.xlu0 %v1163
    %v1165 = vpop.xlane.xlu0 %1164
    %s1166 = sld [smem:[#allocation2]]
    %v1167 = vstv %s1166
    %v1168 = vadd.f32 %v1165, %v1167
    %v1169 = vxor.u32 %v1168, 2147483648
    %v1170 = vmul.f32 %v1169, 1.442695
    %v1171 = vpow.pop %v1170
    %v1172 = vadd.f32 %v1171, 1.0
    %v1173 = vrcp.pop %v1172
    %v1174 = vmul.f32 1.0, %v1173
    %v1176 = vlaneseq
    %v1177 = vand.u32 %v1176, 127
    %v1178 = vlaneseq
    %v1179 = vshrl.u32 %v1178, 7
    %v1180 = vsub.s32 %v1177, %v1179
    %v1181 = vrot.slane %v1174, %v1180
    %vm1183 = vcmask 8192
    %1184 = vst.msk [vmem:[#allocation9] sm:$0x1] %vm1183, %v1181
    // Predicated region
    $region42: #{tpu_custom_call.1} parent=1 // pred_check
      _
    $region43: #{tpu_custom_call.1} parent=1 // pred_check_branch
      %1186 = sbr.rel (0) target = $region45
    $region44: #{tpu_custom_call.1} parent=1 // pred_region
      %s1188 = ssub.s32 16, 16
      %1189 = vsyncadd [#allocation5], %s1188
      %s1191 = sshll.u32 [#allocation9], 4
      %s1192 = int_to_ptr.vmem [resolvable:$true] %s1191
      %1194 = dma.vmem_to_hbm [thread:$0]  %s1192, 16, %s7, [#allocation5]
    $region45: #{tpu_custom_call.1} parent=1 // pred_fallthru
      _
    // Predicated region
    $region46: #{tpu_custom_call.1} parent=1 // pred_check
      _
    $region47: #{tpu_custom_call.1} parent=1 // pred_check_branch
      %1196 = sbr.rel (0) target = $region49
    $region48: #{tpu_custom_call.1} parent=1 // pred_region
      %1197 = dma.done [#allocation5], 16
    $region49: #{tpu_custom_call.1} parent=1 // pred_fallthru
      _
    %1198 = vsyncpa [#allocation4], 1
    %1199 = vsyncpa [#allocation7], 1
    %1200 = vsyncpa [#allocation5], 1

</llo_original>
